<compile_context>
chip_gen: v7x
topology: tpu7x:2x2x1
jax: 0.10.0
libtpu: 0.0.40
codegen_flags: <defaults>
</compile_context>

<pallas_src>
import functools

import jax
import jax.numpy as jnp
from jax.experimental import pallas as pl
from jax.experimental.pallas import tpu as pltpu


def _round_up(x, m):
    return ((x + m - 1) // m) * m


def _mae_kernel(t_ref, p_ref, o_ref, *, tile_n, tile_m, n_rows, n_cols,
                mask_rows, mask_cols):
    i = pl.program_id(0)
    j = pl.program_id(1)

    # The output block (index (i, 0)) is VMEM-resident across the whole j
    # reduction sweep -> use it directly as the accumulator.
    @pl.when(j == 0)
    def _():
        o_ref[...] = jnp.zeros_like(o_ref)

    diff = t_ref[...].astype(jnp.float32) - p_ref[...].astype(jnp.float32)
    vals = jnp.abs(diff)

    # Mask ragged edges (only traced in when the real extents are not
    # tile-aligned; interior blocks are trivially in-bounds so the same
    # comparison is correct for every block).
    if mask_rows or mask_cols:
        mask = None
        if mask_rows:
            row = jax.lax.broadcasted_iota(jnp.int32, (tile_n, tile_m), 0)
            mask = (row + i * tile_n) < n_rows
        if mask_cols:
            col = jax.lax.broadcasted_iota(jnp.int32, (tile_n, tile_m), 1)
            cmask = (col + j * tile_m) < n_cols
            mask = cmask if mask is None else (mask & cmask)
        vals = jnp.where(mask, vals, jnp.float32(0.0))

    # Layout-preserving relabel (tile_n, tile_m) -> (tile_n//8, 8, tile_m)
    # (splits the sublane dim exactly at the 8-row tile boundary), then a
    # reduction over the leading untiled axis = pure cross-vreg VPU adds.
    partial = jnp.sum(vals.reshape(tile_n // 8, 8, tile_m), axis=0)
    o_ref[...] += partial


def loss_mae(truth, pred, *, max_tile_n=256, tile_bytes=2 * 1024 * 1024):
    assert truth.shape == pred.shape and truth.ndim == 5
    B, T, C, H, W = truth.shape
    n_rows = B * T            # rows averaged over (torch.mean over (B, T))
    n_cols = C * H * W        # elements summed per row (axes 2, 3, 4)

    t2 = truth.reshape(n_rows, n_cols)
    p2 = pred.reshape(n_rows, n_cols)
    itemsize = jnp.dtype(truth.dtype).itemsize

    # Sublane/lane aligned tiles, sized so 2 inputs x 2 buffers ~= 8 MiB.
    tile_n = min(max_tile_n, _round_up(n_rows, 8))
    tile_m_budget = max(128, (tile_bytes // (tile_n * itemsize)) // 128 * 128)
    tile_m = min(_round_up(n_cols, 128), tile_m_budget)

    grid_n = pl.cdiv(n_rows, tile_n)
    grid_m = pl.cdiv(n_cols, tile_m)
    mask_rows = (n_rows % tile_n) != 0
    mask_cols = (n_cols % tile_m) != 0

    kernel = functools.partial(
        _mae_kernel,
        tile_n=tile_n, tile_m=tile_m,
        n_rows=n_rows, n_cols=n_cols,
        mask_rows=mask_rows, mask_cols=mask_cols,
    )

    bytes_accessed = 2 * n_rows * n_cols * itemsize + grid_n * 8 * tile_m * 4
    cost = pl.CostEstimate(
        flops=2 * n_rows * n_cols,
        transcendentals=0,
        bytes_accessed=bytes_accessed,
    )

    partials = pl.pallas_call(
        kernel,
        out_shape=jax.ShapeDtypeStruct((grid_n * 8, tile_m), jnp.float32),
        grid_spec=pltpu.PrefetchScalarGridSpec(
            num_scalar_prefetch=0,
            grid=(grid_n, grid_m),
            in_specs=[
                pl.BlockSpec((tile_n, tile_m), lambda i, j: (i, j)),
                pl.BlockSpec((tile_n, tile_m), lambda i, j: (i, j)),
            ],
            out_specs=pl.BlockSpec((8, tile_m), lambda i, j: (i, 0)),
        ),
        compiler_params=pltpu.CompilerParams(
            dimension_semantics=("parallel", "arbitrary"),
            vmem_limit_bytes=32 * 1024 * 1024,
        ),
        cost_estimate=cost,
    )(t2, p2)

    # Single cross-lane collapse, once, on a tiny array.
    return jnp.sum(partials) / jnp.float32(n_rows)


if __name__ == "__main__":
    key = jax.random.PRNGKey(0)
    k1, k2 = jax.random.split(key)

    # Small 5-D shapes consistent with forward(): (B, T, C, H, W)
    B, T, C, H, W = 2, 4, 4, 16, 16
    truth = jax.random.normal(k1, (B, T, C, H, W), dtype=jnp.float32)
    pred = jax.random.normal(k2, (B, T, C, H, W), dtype=jnp.float32)

    result = jax.block_until_ready(loss_mae(truth, pred))
    ref = jnp.mean(jnp.sum(jnp.abs(truth - pred), axis=(2, 3, 4)))
    assert jnp.allclose(result, ref, rtol=1e-5, atol=1e-5), (result, ref)

    # Ragged (non-aligned) shape to exercise the in-kernel edge masking.
    k3, k4 = jax.random.split(k2)
    truth2 = jax.random.normal(k3, (2, 3, 3, 7, 11), dtype=jnp.float32)
    pred2 = jax.random.normal(k4, (2, 3, 3, 7, 11), dtype=jnp.float32)
    result2 = jax.block_until_ready(loss_mae(truth2, pred2))
    ref2 = jnp.mean(jnp.sum(jnp.abs(truth2 - pred2), axis=(2, 3, 4)))
    assert jnp.allclose(result2, ref2, rtol=1e-5, atol=1e-5), (result2, ref2)

    print("KERNEL_OK")
</pallas_src>

<mosaic_0001>
module attributes {stable_mosaic.version = 11 : i64} {
  func.func @_mae_kernel(%arg0: i32, %arg1: i32, %arg2: memref<8x1024xf32, #tpu.memory_space<vmem>>, %arg3: memref<8x1024xf32, #tpu.memory_space<vmem>>, %arg4: memref<8x1024xf32, #tpu.memory_space<vmem>>) attributes {dimension_semantics = [#tpu.dimension_semantics<parallel>, #tpu.dimension_semantics<arbitrary>], iteration_bounds = array<i64: 1, 1>, scalar_prefetch = 0 : i64, scratch_operands = 0 : i64, tpu.core_type = #tpu.core_type<tc>, window_params = [{transform_indices = @transform_0, window_bounds = array<i64: 8, 1024>}, {transform_indices = @transform_1, window_bounds = array<i64: 8, 1024>}, {transform_indices = @transform_2, window_bounds = array<i64: 8, 1024>}]} {
    %c0_i32 = arith.constant 0 : i32
    %0 = arith.cmpi eq, %arg1, %c0_i32 : i32
    %1 = arith.extui %0 : i1 to i32
    %c0_i32_0 = arith.constant 0 : i32
    %2 = arith.cmpi ne, %1, %c0_i32_0 : i32
    scf.if %2 {
      %cst_8 = arith.constant 0.000000e+00 : f32
      %12 = vector.broadcast %cst_8 : f32 to vector<8x1024xf32>
      %c0_9 = arith.constant 0 : index
      %c0_10 = arith.constant 0 : index
      %13 = vector.load %arg4[%c0_9, %c0_10] : memref<8x1024xf32, #tpu.memory_space<vmem>>, vector<8x1024xf32>
      tpu.vector_store %arg4[%c0_9, %c0_10], %12 {strides = array<i32>} : memref<8x1024xf32, #tpu.memory_space<vmem>>, vector<8x1024xf32>,
    } else {
    }
    %c0 = arith.constant 0 : index
    %c0_1 = arith.constant 0 : index
    %3 = vector.load %arg2[%c0, %c0_1] : memref<8x1024xf32, #tpu.memory_space<vmem>>, vector<8x1024xf32>
    %c0_2 = arith.constant 0 : index
    %c0_3 = arith.constant 0 : index
    %4 = vector.load %arg3[%c0_2, %c0_3] : memref<8x1024xf32, #tpu.memory_space<vmem>>, vector<8x1024xf32>
    %5 = arith.subf %3, %4 : vector<8x1024xf32>
    %6 = math.absf %5 : vector<8x1024xf32>
    %7 = vector.shape_cast %6 : vector<8x1024xf32> to vector<1x8x1024xf32>
    %cst = arith.constant dense<0.000000e+00> : vector<8x1024xf32>
    %8 = vector.multi_reduction <add>, %7, %cst [0] : vector<1x8x1024xf32> to vector<8x1024xf32>
    %c0_4 = arith.constant 0 : index
    %c0_5 = arith.constant 0 : index
    %9 = vector.load %arg4[%c0_4, %c0_5] : memref<8x1024xf32, #tpu.memory_space<vmem>>, vector<8x1024xf32>
    %10 = arith.addf %9, %8 : vector<8x1024xf32>
    %c0_6 = arith.constant 0 : index
    %c0_7 = arith.constant 0 : index
    %11 = vector.load %arg4[%c0_6, %c0_7] : memref<8x1024xf32, #tpu.memory_space<vmem>>, vector<8x1024xf32>
    tpu.vector_store %arg4[%c0_6, %c0_7], %10 {strides = array<i32>} : memref<8x1024xf32, #tpu.memory_space<vmem>>, vector<8x1024xf32>,
    return
  }
  func.func @transform_0(%arg0: i32, %arg1: i32) -> (i32, i32) {
    %c0_i32 = arith.constant 0 : i32
    return %arg0, %arg1 : i32, i32
  }
  func.func @transform_1(%arg0: i32, %arg1: i32) -> (i32, i32) {
    %c0_i32 = arith.constant 0 : i32
    return %arg0, %arg1 : i32, i32
  }
  func.func @transform_2(%arg0: i32, %arg1: i32) -> (i32, i32) {
    %c0_i32 = arith.constant 0 : i32
    %c0_i32_0 = arith.constant 0 : i32
    return %arg0, %c0_i32 : i32, i32
  }
}

</mosaic_0001>

<llo_original>
// kernel: tpu_custom_call.1
$region0: #{tpu_custom_call.1}
  #allocation0 [shape = 'u32[]', space=smem, size = 0x4, offset = 0x4, fixed_abs, tag = 'smem constant byte address 0x4 - core index']
  #allocation1 [shape = 'u32[144,128]{1,0:T(1,128)}', space=vmem, size = 0x12000, scoped, tag = 'internal scratch']
  %s0 = inlined_call_operand.hbm [shape: f32[8,1024], index: 0, kind: input, shape index: {}]
  %s1 = inlined_call_operand.hbm [shape: f32[8,1024], index: 1, kind: input, shape index: {}]
  %s2 = inlined_call_operand.hbm [shape: f32[8,1024], index: 2, kind: output, shape index: {}]
  %s3 = sld [smem:[#allocation0]]
  $region30: #{tpu_custom_call.1} parent=0
    _
  %s5 = ssub.s32 1, %s3
  %s6 = scalar_select 0, %s5, %s3
  $region1: #{tpu_custom_call.1} parent=0
    #allocation2 [shape = 'u8[32768]{0}', space=vmem, size = 0x8000, scoped, tag = 'input window, operand 0, single buffered']
    #allocation3 [shape = 's32[1]{0}', space=sflag, size = 0x4, scoped, tag = 'scoped memory for tpu_custom_call.1']
    #allocation4 [shape = 's32[1]{0}', space=sflag, size = 0x4, scoped, tag = 'scoped memory for tpu_custom_call.1']
    #allocation5 [shape = 'u8[32768]{0}', space=vmem, size = 0x8000, scoped, tag = 'input window, operand 1, single buffered']
    #allocation6 [shape = 's32[1]{0}', space=sflag, size = 0x4, scoped, tag = 'scoped memory for tpu_custom_call.1']
    #allocation7 [shape = 'u8[32768]{0}', space=vmem, size = 0x8000, scoped, tag = 'output window, operand 0, single buffered']
    %7 = vsyncpa [#allocation3], 0
    %8 = vsyncpa [#allocation6], 0
    %9 = vsyncpa [#allocation4], 0
    // Predicated region
    $region2: #{tpu_custom_call.1} parent=1 // pred_check
      _
    $region3: #{tpu_custom_call.1} parent=1 // pred_check_branch
      %11 = sbr.rel (0) target = $region5
    $region4: #{tpu_custom_call.1} parent=1 // pred_region
      %s13 = ssub.s32 1024, 1024
      %14 = vsyncadd [#allocation3], %s13
      %s16 = sshll.u32 [#allocation2], 4
      %s17 = int_to_ptr.vmem [resolvable:$true] %s16
      %19 = dma.hbm_to_vmem [thread:$0]  %s0, 1024, %s17, [#allocation3]
    $region5: #{tpu_custom_call.1} parent=1 // pred_fallthru
      _
    // Predicated region
    $region6: #{tpu_custom_call.1} parent=1 // pred_check
      _
    $region7: #{tpu_custom_call.1} parent=1 // pred_check_branch
      %21 = sbr.rel (0) target = $region9
    $region8: #{tpu_custom_call.1} parent=1 // pred_region
      %s23 = ssub.s32 1024, 1024
      %24 = vsyncadd [#allocation6], %s23
      %s26 = sshll.u32 [#allocation5], 4
      %s27 = int_to_ptr.vmem [resolvable:$true] %s26
      %29 = dma.hbm_to_vmem [thread:$0]  %s1, 1024, %s27, [#allocation6]
    $region9: #{tpu_custom_call.1} parent=1 // pred_fallthru
      _
    // Predicated region
    $region10: #{tpu_custom_call.1} parent=1 // pred_check
      _
    $region11: #{tpu_custom_call.1} parent=1 // pred_check_branch
      %31 = sbr.rel (0) target = $region13
    $region12: #{tpu_custom_call.1} parent=1 // pred_region
      %32 = dma.done [#allocation3], 1024
    $region13: #{tpu_custom_call.1} parent=1 // pred_fallthru
      _
    // Predicated region
    $region14: #{tpu_custom_call.1} parent=1 // pred_check
      _
    $region15: #{tpu_custom_call.1} parent=1 // pred_check_branch
      %34 = sbr.rel (0) target = $region17
    $region16: #{tpu_custom_call.1} parent=1 // pred_region
      %35 = dma.done [#allocation6], 1024
    $region17: #{tpu_custom_call.1} parent=1 // pred_fallthru
      _
    %p36 = scmp.eq.s32.totalorder 0, 0
    // Predicated region
    $region18: #{tpu_custom_call.1} parent=1 // pred_check
      %p37 = pneg %p36
    $region19: #{tpu_custom_call.1} parent=1 // pred_check_branch
      %39 = sbr.rel (%p37) target = $region21
    $region20: #{tpu_custom_call.1} parent=1 // pred_region
      %40 = vst [vmem:[#allocation7] sm:$0xff] 0.0
      %41 = vst [vmem:[#allocation7 + $0x8] sm:$0xff] 0.0
      %42 = vst [vmem:[#allocation7 + $0x10] sm:$0xff] 0.0
      %43 = vst [vmem:[#allocation7 + $0x18] sm:$0xff] 0.0
      %44 = vst [vmem:[#allocation7 + $0x20] sm:$0xff] 0.0
      %45 = vst [vmem:[#allocation7 + $0x28] sm:$0xff] 0.0
      %46 = vst [vmem:[#allocation7 + $0x30] sm:$0xff] 0.0
      %47 = vst [vmem:[#allocation7 + $0x38] sm:$0xff] 0.0
    $region21: #{tpu_custom_call.1} parent=1 // pred_fallthru
      _
    %v48 = vld [vmem:[#allocation2] sm:$0xff]
    %v49 = vld [vmem:[#allocation2 + $0x8] sm:$0xff]
    %v50 = vld [vmem:[#allocation2 + $0x10] sm:$0xff]
    %v51 = vld [vmem:[#allocation2 + $0x18] sm:$0xff]
    %v52 = vld [vmem:[#allocation2 + $0x20] sm:$0xff]
    %v53 = vld [vmem:[#allocation2 + $0x28] sm:$0xff]
    %v54 = vld [vmem:[#allocation2 + $0x30] sm:$0xff]
    %v55 = vld [vmem:[#allocation2 + $0x38] sm:$0xff]
    %v56 = vld [vmem:[#allocation5] sm:$0xff]
    %v57 = vld [vmem:[#allocation5 + $0x8] sm:$0xff]
    %v58 = vld [vmem:[#allocation5 + $0x10] sm:$0xff]
    %v59 = vld [vmem:[#allocation5 + $0x18] sm:$0xff]
    %v60 = vld [vmem:[#allocation5 + $0x20] sm:$0xff]
    %v61 = vld [vmem:[#allocation5 + $0x28] sm:$0xff]
    %v62 = vld [vmem:[#allocation5 + $0x30] sm:$0xff]
    %v63 = vld [vmem:[#allocation5 + $0x38] sm:$0xff]
    %v64 = vsub.f32 %v48, %v56
    %v65 = vsub.f32 %v49, %v57
    %v66 = vsub.f32 %v50, %v58
    %v67 = vsub.f32 %v51, %v59
    %v68 = vsub.f32 %v52, %v60
    %v69 = vsub.f32 %v53, %v61
    %v70 = vsub.f32 %v54, %v62
    %v71 = vsub.f32 %v55, %v63
    %v72 = vand.u32 2147483647, %v64
    %v73 = vand.u32 2147483647, %v65
    %v74 = vand.u32 2147483647, %v66
    %v75 = vand.u32 2147483647, %v67
    %v76 = vand.u32 2147483647, %v68
    %v77 = vand.u32 2147483647, %v69
    %v78 = vand.u32 2147483647, %v70
    %v79 = vand.u32 2147483647, %v71
    %v80 = vadd.f32 %v72, 0.0
    %v81 = vadd.f32 %v73, 0.0
    %v82 = vadd.f32 %v74, 0.0
    %v83 = vadd.f32 %v75, 0.0
    %v84 = vadd.f32 %v76, 0.0
    %v85 = vadd.f32 %v77, 0.0
    %v86 = vadd.f32 %v78, 0.0
    %v87 = vadd.f32 %v79, 0.0
    %v88 = vld [vmem:[#allocation7] sm:$0xff]
    %v89 = vld [vmem:[#allocation7 + $0x8] sm:$0xff]
    %v90 = vld [vmem:[#allocation7 + $0x10] sm:$0xff]
    %v91 = vld [vmem:[#allocation7 + $0x18] sm:$0xff]
    %v92 = vld [vmem:[#allocation7 + $0x20] sm:$0xff]
    %v93 = vld [vmem:[#allocation7 + $0x28] sm:$0xff]
    %v94 = vld [vmem:[#allocation7 + $0x30] sm:$0xff]
    %v95 = vld [vmem:[#allocation7 + $0x38] sm:$0xff]
    %v96 = vadd.f32 %v88, %v80
    %v97 = vadd.f32 %v89, %v81
    %v98 = vadd.f32 %v90, %v82
    %v99 = vadd.f32 %v91, %v83
    %v100 = vadd.f32 %v92, %v84
    %v101 = vadd.f32 %v93, %v85
    %v102 = vadd.f32 %v94, %v86
    %v103 = vadd.f32 %v95, %v87
    %104 = vst [vmem:[#allocation7] sm:$0xff] %v96
    %105 = vst [vmem:[#allocation7 + $0x8] sm:$0xff] %v97
    %106 = vst [vmem:[#allocation7 + $0x10] sm:$0xff] %v98
    %107 = vst [vmem:[#allocation7 + $0x18] sm:$0xff] %v99
    %108 = vst [vmem:[#allocation7 + $0x20] sm:$0xff] %v100
    %109 = vst [vmem:[#allocation7 + $0x28] sm:$0xff] %v101
    %110 = vst [vmem:[#allocation7 + $0x30] sm:$0xff] %v102
    %111 = vst [vmem:[#allocation7 + $0x38] sm:$0xff] %v103
    // Predicated region
    $region22: #{tpu_custom_call.1} parent=1 // pred_check
      _
    $region23: #{tpu_custom_call.1} parent=1 // pred_check_branch
      %113 = sbr.rel (0) target = $region25
    $region24: #{tpu_custom_call.1} parent=1 // pred_region
      %s115 = ssub.s32 1024, 1024
      %116 = vsyncadd [#allocation4], %s115
      %s118 = sshll.u32 [#allocation7], 4
      %s119 = int_to_ptr.vmem [resolvable:$true] %s118
      %121 = dma.vmem_to_hbm [thread:$0]  %s119, 1024, %s2, [#allocation4]
    $region25: #{tpu_custom_call.1} parent=1 // pred_fallthru
      _
    // Predicated region
    $region26: #{tpu_custom_call.1} parent=1 // pred_check
      _
    $region27: #{tpu_custom_call.1} parent=1 // pred_check_branch
      %123 = sbr.rel (0) target = $region29
    $region28: #{tpu_custom_call.1} parent=1 // pred_region
      %124 = dma.done [#allocation4], 1024
    $region29: #{tpu_custom_call.1} parent=1 // pred_fallthru
      _
    %125 = vsyncpa [#allocation3], 1
    %126 = vsyncpa [#allocation6], 1
    %127 = vsyncpa [#allocation4], 1

</llo_original>
